<compile_context>
chip_gen: v5e
topology: v5e:2x2
jax: 0.10.0
libtpu: 0.0.40
codegen_flags: <defaults>
</compile_context>

<pallas_src>
import math

import jax
import jax.numpy as jnp
from jax import lax
from jax.experimental import pallas as pl
from jax.experimental.pallas import tpu as pltpu

# ----- model hyper-params (small, consistent with module __init__) -----
B = 2          # batch
S = 8          # sequence length
HIDDEN = 32    # d_model
HEADS = 4      # attention heads
D_K = HIDDEN // HEADS
D_FF = 128     # feed_forward_hidden
EPS = 1e-5
NEG_INF = -1000000000.0


def _layer_norm(v, g, b):
    mu = jnp.mean(v, axis=-1, keepdims=True)
    var = jnp.mean((v - mu) ** 2, axis=-1, keepdims=True)
    return (v - mu) * lax.rsqrt(var + EPS) * g + b


def _gelu_exact(x):
    # Matches torch.nn.GELU() default (erf-based).  tanh-approx GELU would
    # move to the EUP slot but breaks exact torch parity -> kept exact.
    return 0.5 * x * (1.0 + lax.erf(x * (1.0 / math.sqrt(2.0))))


def transformer_block_kernel(
    x_ref,        # [B*S, HIDDEN]
    amask_ref,    # [B, S, S]  additive mask (0.0 or -1e9)
    wqkv_ref,     # [HIDDEN, 3*HIDDEN]   (Q|K|V fused)
    bqkv_ref,     # [1, 3*HIDDEN]
    wo_ref,       # [HIDDEN, HIDDEN]
    w1_ref,       # [HIDDEN, D_FF]
    b1_ref,       # [1, D_FF]
    w2_ref,       # [D_FF, HIDDEN]
    vecs_ref,     # [6+HEADS, HIDDEN]: ln1_g, ln1_b, ln2_g, ln2_b, bo, b2, head_sel[4]
    out_ref,      # [B*S, HIDDEN]
):
    x = x_ref[...]
    vecs = vecs_ref[...]
    ln1_g, ln1_b = vecs[0:1, :], vecs[1:2, :]
    ln2_g, ln2_b = vecs[2:3, :], vecs[3:4, :]
    bo, b2 = vecs[4:5, :], vecs[5:6, :]
    head_sel = vecs[6:6 + HEADS, :]          # [HEADS, HIDDEN] 0/1 lane selectors

    # ---- input sublayer: x + attention(LayerNorm(x)) ----
    xn = _layer_norm(x, ln1_g, ln1_b)

    # Fused Q|K|V projection: one [16,32]x[32,96] MXU matmul + one bias add.
    qkv = jnp.dot(xn, wqkv_ref[...], preferred_element_type=jnp.float32) + bqkv_ref[...]

    # Lane-aligned, 32-wide slices only (no 8-wide head slices).
    q = qkv[:, 0:HIDDEN].reshape(B, S, HIDDEN)
    k = qkv[:, HIDDEN:2 * HIDDEN].reshape(B, S, HIDDEN)
    v = qkv[:, 2 * HIDDEN:3 * HIDDEN].reshape(B, S, HIDDEN)

    amask = amask_ref[...]                   # [B, S, S]
    scale = 1.0 / math.sqrt(D_K)

    # Per-head attention via lane-selector masks: the contraction over the
    # masked K restricts the dot product to that head's d_k columns, and the
    # masked V places the head's context directly in its output lane block,
    # so the head contexts simply accumulate (no concat, no 8-wide slices).
    ctx = jnp.zeros((B, S, HIDDEN), jnp.float32)
    for h in range(HEADS):                   # static 4-way unroll
        sel = head_sel[h:h + 1, :].reshape(1, 1, HIDDEN)      # [1,1,HIDDEN]
        s = jnp.einsum('bqd,bkd->bqk', q, k * sel,
                       preferred_element_type=jnp.float32) * scale + amask
        s = s - jnp.max(s, axis=-1, keepdims=True)
        e = jnp.exp(s)
        denom = jnp.sum(e, axis=-1, keepdims=True)
        r = pl.reciprocal(denom, approx=True)     # EUP slot (idle otherwise)
        r = r * (2.0 - denom * r)                 # one Newton step -> f32 accuracy
        p = e * r
        ctx = ctx + jnp.einsum('bqk,bkd->bqd', p, v * sel,
                               preferred_element_type=jnp.float32)

    # Single output projection over all heads.
    attn = jnp.dot(ctx.reshape(B * S, HIDDEN), wo_ref[...],
                   preferred_element_type=jnp.float32) + bo
    x1 = x + attn

    # ---- output sublayer: x1 + FFN(LayerNorm(x1)) ----
    x1n = _layer_norm(x1, ln2_g, ln2_b)
    h1 = jnp.dot(x1n, w1_ref[...], preferred_element_type=jnp.float32) + b1_ref[...]
    h1 = _gelu_exact(h1)
    ff = jnp.dot(h1, w2_ref[...], preferred_element_type=jnp.float32) + b2

    out_ref[...] = (x1 + ff).astype(out_ref.dtype)


def transformer_block(x, mask, params):
    """x: [B, S, H] f32, mask: [B, 1, S, S] f32 (1.0 == masked)."""
    (ln1_g, ln1_b, wq, bq, wk, bk, wv, bv, wo, bo,
     ln2_g, ln2_b, w1, b1, w2, b2) = params

    # Wrapper-side packing (cheap one-time XLA ops, outside the kernel).
    x2d = x.reshape(B * S, HIDDEN)
    amask = mask[:, 0, :, :] * NEG_INF                        # [B, S, S] additive
    wqkv = jnp.concatenate([wq, wk, wv], axis=1)              # [H, 3H]
    bqkv = jnp.concatenate([bq, bk, bv], axis=1)              # [1, 3H]
    head_ids = jnp.arange(HIDDEN)[None, :] // D_K             # [1, H]
    head_sel = (head_ids == jnp.arange(HEADS)[:, None]).astype(jnp.float32)  # [HEADS, H]
    vecs = jnp.concatenate(
        [ln1_g, ln1_b, ln2_g, ln2_b, bo, b2, head_sel], axis=0)  # [6+HEADS, H]

    vmem_spec = lambda: pl.BlockSpec(memory_space=pltpu.MemorySpace.VMEM)
    cost = pl.CostEstimate(
        flops=(2 * B * S * HIDDEN * 3 * HIDDEN            # fused QKV
               + 4 * HEADS * B * S * S * HIDDEN           # scores + ctx
               + 2 * B * S * HIDDEN * HIDDEN              # output proj
               + 4 * B * S * HIDDEN * D_FF),              # FFN
        transcendentals=(B * S * D_FF                     # erf
                         + HEADS * B * S * S              # exp
                         + HEADS * B * S + 2 * B * S),    # recip + rsqrt
        bytes_accessed=4 * (2 * B * S * HIDDEN + B * S * S
                            + HIDDEN * 3 * HIDDEN + 3 * HIDDEN
                            + HIDDEN * HIDDEN + HIDDEN * D_FF + D_FF
                            + D_FF * HIDDEN + (6 + HEADS) * HIDDEN),
    )

    # Single block, no grid: the whole problem fits easily in VMEM and any
    # grid step would only add per-step pipeline overhead at this size.
    out2d = pl.pallas_call(
        transformer_block_kernel,
        out_shape=jax.ShapeDtypeStruct((B * S, HIDDEN), jnp.float32),
        in_specs=[vmem_spec() for _ in range(9)],
        out_specs=vmem_spec(),
        cost_estimate=cost,
    )(x2d, amask, wqkv, bqkv, wo, w1, b1, w2, vecs)
    return out2d.reshape(B, S, HIDDEN)


def reference_block(x, mask_bool, params):
    """Pure-JAX reference reproducing the PyTorch forward (dropout = identity)."""
    (ln1_g, ln1_b, wq, bq, wk, bk, wv, bv, wo, bo,
     ln2_g, ln2_b, w1, b1, w2, b2) = params

    def ln(v, g, b):
        mu = jnp.mean(v, axis=-1, keepdims=True)
        var = jnp.mean((v - mu) ** 2, axis=-1, keepdims=True)
        return (v - mu) / jnp.sqrt(var + EPS) * g + b

    xn = ln(x, ln1_g, ln1_b)
    q = xn @ wq + bq
    k = xn @ wk + bk
    v = xn @ wv + bv
    reshape_heads = lambda t: t.reshape(B, S, HEADS, D_K).transpose(0, 2, 1, 3)
    qh, kh, vh = map(reshape_heads, (q, k, v))
    scores = jnp.einsum('bhqd,bhkd->bhqk', qh, kh) / math.sqrt(D_K)
    scores = jnp.where(mask_bool, NEG_INF, scores)
    p = jax.nn.softmax(scores, axis=-1)
    ctx = jnp.einsum('bhqk,bhkd->bhqd', p, vh)
    ctx = ctx.transpose(0, 2, 1, 3).reshape(B, S, HIDDEN)
    attn_out = ctx @ wo + bo
    x1 = x + attn_out

    x1n = ln(x1, ln2_g, ln2_b)
    h1 = jax.nn.gelu(x1n @ w1 + b1, approximate=False)
    ff = h1 @ w2 + b2
    return x1 + ff


def init_params(key):
    ks = jax.random.split(key, 8)
    scale = 0.02
    # Linear weights stored as [in, out] (i.e. already transposed vs torch).
    wq = scale * jax.random.normal(ks[0], (HIDDEN, HIDDEN), jnp.float32)
    wk = scale * jax.random.normal(ks[1], (HIDDEN, HIDDEN), jnp.float32)
    wv = scale * jax.random.normal(ks[2], (HIDDEN, HIDDEN), jnp.float32)
    wo = scale * jax.random.normal(ks[3], (HIDDEN, HIDDEN), jnp.float32)
    w1 = scale * jax.random.normal(ks[4], (HIDDEN, D_FF), jnp.float32)
    w2 = scale * jax.random.normal(ks[5], (D_FF, HIDDEN), jnp.float32)
    bq = 0.01 * jax.random.normal(ks[6], (1, HIDDEN), jnp.float32)
    bk = jnp.zeros((1, HIDDEN), jnp.float32)
    bv = jnp.zeros((1, HIDDEN), jnp.float32)
    bo = jnp.zeros((1, HIDDEN), jnp.float32)
    b1 = 0.01 * jax.random.normal(ks[7], (1, D_FF), jnp.float32)
    b2 = jnp.zeros((1, HIDDEN), jnp.float32)
    ln1_g = jnp.ones((1, HIDDEN), jnp.float32)
    ln1_b = jnp.zeros((1, HIDDEN), jnp.float32)
    ln2_g = jnp.ones((1, HIDDEN), jnp.float32)
    ln2_b = jnp.zeros((1, HIDDEN), jnp.float32)
    return (ln1_g, ln1_b, wq, bq, wk, bk, wv, bv, wo, bo,
            ln2_g, ln2_b, w1, b1, w2, b2)


if __name__ == "__main__":
    key = jax.random.PRNGKey(0)
    kx, kp = jax.random.split(key)

    x = jax.random.normal(kx, (B, S, HIDDEN), jnp.float32)

    # padding-style mask: batch 0 sees all 8 keys, batch 1 only the first 5.
    valid_len = jnp.array([S, 5], jnp.int32)
    key_pos = jnp.arange(S)[None, :] >= valid_len[:, None]       # [B, S] True == masked
    mask_bool = jnp.broadcast_to(key_pos[:, None, None, :], (B, 1, S, S))
    mask_f32 = mask_bool.astype(jnp.float32)

    params = init_params(kp)

    out = transformer_block(x, mask_f32, params)
    out = jax.block_until_ready(out)

    ref = reference_block(x, mask_bool, params)
    assert out.shape == (B, S, HIDDEN)
    assert jnp.allclose(out, ref, atol=1e-4, rtol=1e-4), (
        f"max err {jnp.max(jnp.abs(out - ref))}")

    print("KERNEL_OK")
</pallas_src>

<mosaic_0001>
module attributes {stable_mosaic.version = 11 : i64} {
  func.func @transformer_block_kernel(%arg0: memref<16x32xf32, #tpu.memory_space<vmem>>, %arg1: memref<2x8x8xf32, #tpu.memory_space<vmem>>, %arg2: memref<32x96xf32, #tpu.memory_space<vmem>>, %arg3: memref<1x96xf32, #tpu.memory_space<vmem>>, %arg4: memref<32x32xf32, #tpu.memory_space<vmem>>, %arg5: memref<32x128xf32, #tpu.memory_space<vmem>>, %arg6: memref<1x128xf32, #tpu.memory_space<vmem>>, %arg7: memref<128x32xf32, #tpu.memory_space<vmem>>, %arg8: memref<10x32xf32, #tpu.memory_space<vmem>>, %arg9: memref<16x32xf32, #tpu.memory_space<vmem>>) attributes {dimension_semantics = [], scalar_prefetch = 0 : i64, scratch_operands = 0 : i64, tpu.core_type = #tpu.core_type<tc>} {
    %c0 = arith.constant 0 : index
    %c0_0 = arith.constant 0 : index
    %0 = vector.load %arg0[%c0, %c0_0] : memref<16x32xf32, #tpu.memory_space<vmem>>, vector<16x32xf32>
    %c0_1 = arith.constant 0 : index
    %c0_2 = arith.constant 0 : index
    %1 = vector.load %arg8[%c0_1, %c0_2] : memref<10x32xf32, #tpu.memory_space<vmem>>, vector<10x32xf32>
    %2 = vector.extract_strided_slice %1 {offsets = [0, 0], sizes = [1, 32], strides = [1, 1]} : vector<10x32xf32> to vector<1x32xf32>
    %3 = vector.extract_strided_slice %1 {offsets = [1, 0], sizes = [1, 32], strides = [1, 1]} : vector<10x32xf32> to vector<1x32xf32>
    %4 = vector.extract_strided_slice %1 {offsets = [2, 0], sizes = [1, 32], strides = [1, 1]} : vector<10x32xf32> to vector<1x32xf32>
    %5 = vector.extract_strided_slice %1 {offsets = [3, 0], sizes = [1, 32], strides = [1, 1]} : vector<10x32xf32> to vector<1x32xf32>
    %6 = vector.extract_strided_slice %1 {offsets = [4, 0], sizes = [1, 32], strides = [1, 1]} : vector<10x32xf32> to vector<1x32xf32>
    %7 = vector.extract_strided_slice %1 {offsets = [5, 0], sizes = [1, 32], strides = [1, 1]} : vector<10x32xf32> to vector<1x32xf32>
    %8 = vector.extract_strided_slice %1 {offsets = [6, 0], sizes = [4, 32], strides = [1, 1]} : vector<10x32xf32> to vector<4x32xf32>
    %cst = arith.constant dense<0.000000e+00> : vector<16xf32>
    %9 = vector.multi_reduction <add>, %0, %cst [1] : vector<16x32xf32> to vector<16xf32>
    %10 = vector.shape_cast %9 : vector<16xf32> to vector<16x1xf32>
    %cst_3 = arith.constant 3.200000e+01 : f32
    %11 = vector.broadcast %cst_3 : f32 to vector<16x1xf32>
    %12 = arith.divf %10, %11 : vector<16x1xf32>
    %13 = vector.broadcast %12 : vector<16x1xf32> to vector<16x32xf32>
    %14 = arith.subf %0, %13 : vector<16x32xf32>
    %15 = arith.mulf %14, %14 : vector<16x32xf32>
    %cst_4 = arith.constant dense<0.000000e+00> : vector<16xf32>
    %16 = vector.multi_reduction <add>, %15, %cst_4 [1] : vector<16x32xf32> to vector<16xf32>
    %17 = vector.shape_cast %16 : vector<16xf32> to vector<16x1xf32>
    %cst_5 = arith.constant 3.200000e+01 : f32
    %18 = vector.broadcast %cst_5 : f32 to vector<16x1xf32>
    %19 = arith.divf %17, %18 : vector<16x1xf32>
    %20 = vector.broadcast %12 : vector<16x1xf32> to vector<16x32xf32>
    %21 = arith.subf %0, %20 : vector<16x32xf32>
    %cst_6 = arith.constant 9.99999974E-6 : f32
    %22 = vector.broadcast %cst_6 : f32 to vector<16x1xf32>
    %23 = arith.addf %19, %22 : vector<16x1xf32>
    %24 = math.rsqrt %23 : vector<16x1xf32>
    %25 = vector.broadcast %24 : vector<16x1xf32> to vector<16x32xf32>
    %26 = arith.mulf %21, %25 : vector<16x32xf32>
    %27 = vector.broadcast %2 : vector<1x32xf32> to vector<16x32xf32>
    %28 = arith.mulf %26, %27 : vector<16x32xf32>
    %29 = vector.broadcast %3 : vector<1x32xf32> to vector<16x32xf32>
    %30 = arith.addf %28, %29 : vector<16x32xf32>
    %c0_7 = arith.constant 0 : index
    %c0_8 = arith.constant 0 : index
    %31 = vector.load %arg2[%c0_7, %c0_8] : memref<32x96xf32, #tpu.memory_space<vmem>>, vector<32x96xf32>
    %cst_9 = arith.constant dense<0.000000e+00> : vector<16x96xf32>
    %32 = tpu.matmul %30, %31, %cst_9 {dimension_numbers = #tpu.dot_dimension_numbers<[1], [0], [0], [1], [0, 0, 1, 1], [], []>} : vector<16x32xf32>, vector<32x96xf32>, vector<16x96xf32> -> vector<16x96xf32>
    %c0_10 = arith.constant 0 : index
    %c0_11 = arith.constant 0 : index
    %33 = vector.load %arg3[%c0_10, %c0_11] : memref<1x96xf32, #tpu.memory_space<vmem>>, vector<1x96xf32>
    %34 = vector.broadcast %33 : vector<1x96xf32> to vector<16x96xf32>
    %35 = arith.addf %32, %34 : vector<16x96xf32>
    %36 = vector.extract_strided_slice %35 {offsets = [0, 0], sizes = [16, 32], strides = [1, 1]} : vector<16x96xf32> to vector<16x32xf32>
    %37 = vector.shape_cast %36 : vector<16x32xf32> to vector<2x8x32xf32>
    %38 = vector.extract_strided_slice %35 {offsets = [0, 32], sizes = [16, 32], strides = [1, 1]} : vector<16x96xf32> to vector<16x32xf32>
    %39 = vector.shape_cast %38 : vector<16x32xf32> to vector<2x8x32xf32>
    %40 = vector.extract_strided_slice %35 {offsets = [0, 64], sizes = [16, 32], strides = [1, 1]} : vector<16x96xf32> to vector<16x32xf32>
    %41 = vector.shape_cast %40 : vector<16x32xf32> to vector<2x8x32xf32>
    %c0_12 = arith.constant 0 : index
    %c0_13 = arith.constant 0 : index
    %c0_14 = arith.constant 0 : index
    %42 = vector.load %arg1[%c0_12, %c0_13, %c0_14] : memref<2x8x8xf32, #tpu.memory_space<vmem>>, vector<2x8x8xf32>
    %cst_15 = arith.constant 0.000000e+00 : f32
    %43 = vector.broadcast %cst_15 : f32 to vector<2x8x32xf32>
    %44 = vector.extract_strided_slice %8 {offsets = [0, 0], sizes = [1, 32], strides = [1, 1]} : vector<4x32xf32> to vector<1x32xf32>
    %45 = vector.shape_cast %44 : vector<1x32xf32> to vector<1x1x32xf32>
    %46 = vector.broadcast %45 : vector<1x1x32xf32> to vector<2x8x32xf32>
    %47 = arith.mulf %39, %46 : vector<2x8x32xf32>
    "tpu.trace_start"() <{level = 10 : i32, message = "bqd,bkd->bqk"}> : () -> ()
    %cst_16 = arith.constant dense<0.000000e+00> : vector<2x8x8xf32>
    %48 = tpu.matmul %37, %47, %cst_16 {dimension_numbers = #tpu.dot_dimension_numbers<[2], [2], [1], [1], [0, 0, 0, 1, 1, 1], [0], [0]>} : vector<2x8x32xf32>, vector<2x8x32xf32>, vector<2x8x8xf32> -> vector<2x8x8xf32>
    "tpu.trace_stop"() : () -> ()
    %cst_17 = arith.constant 0.353553385 : f32
    %49 = vector.broadcast %cst_17 : f32 to vector<2x8x8xf32>
    %50 = arith.mulf %48, %49 : vector<2x8x8xf32>
    %51 = arith.addf %50, %42 : vector<2x8x8xf32>
    %cst_18 = arith.constant dense<0xFF800000> : vector<2x8xf32>
    %52 = vector.multi_reduction <maximumf>, %51, %cst_18 [2] : vector<2x8x8xf32> to vector<2x8xf32>
    %53 = vector.shape_cast %52 : vector<2x8xf32> to vector<2x8x1xf32>
    %54 = vector.broadcast %53 : vector<2x8x1xf32> to vector<2x8x8xf32>
    %55 = arith.subf %51, %54 : vector<2x8x8xf32>
    %56 = math.exp %55 : vector<2x8x8xf32>
    %cst_19 = arith.constant dense<0.000000e+00> : vector<2x8xf32>
    %57 = vector.multi_reduction <add>, %56, %cst_19 [2] : vector<2x8x8xf32> to vector<2x8xf32>
    %58 = vector.shape_cast %57 : vector<2x8xf32> to vector<2x8x1xf32>
    %59 = tpu.reciprocal %58 {approx = true} : vector<2x8x1xf32> -> vector<2x8x1xf32>
    %60 = arith.mulf %58, %59 : vector<2x8x1xf32>
    %cst_20 = arith.constant 2.000000e+00 : f32
    %61 = vector.broadcast %cst_20 : f32 to vector<2x8x1xf32>
    %62 = arith.subf %61, %60 : vector<2x8x1xf32>
    %63 = arith.mulf %59, %62 : vector<2x8x1xf32>
    %64 = vector.broadcast %63 : vector<2x8x1xf32> to vector<2x8x8xf32>
    %65 = arith.mulf %56, %64 : vector<2x8x8xf32>
    %66 = vector.broadcast %45 : vector<1x1x32xf32> to vector<2x8x32xf32>
    %67 = arith.mulf %41, %66 : vector<2x8x32xf32>
    "tpu.trace_start"() <{level = 10 : i32, message = "bqk,bkd->bqd"}> : () -> ()
    %cst_21 = arith.constant dense<0.000000e+00> : vector<2x8x32xf32>
    %68 = tpu.matmul %65, %67, %cst_21 {dimension_numbers = #tpu.dot_dimension_numbers<[2], [1], [1], [2], [0, 0, 0, 1, 1, 2], [0], [0]>} : vector<2x8x8xf32>, vector<2x8x32xf32>, vector<2x8x32xf32> -> vector<2x8x32xf32>
    "tpu.trace_stop"() : () -> ()
    %69 = arith.addf %43, %68 : vector<2x8x32xf32>
    %70 = vector.extract_strided_slice %8 {offsets = [1, 0], sizes = [1, 32], strides = [1, 1]} : vector<4x32xf32> to vector<1x32xf32>
    %71 = vector.shape_cast %70 : vector<1x32xf32> to vector<1x1x32xf32>
    %72 = vector.broadcast %71 : vector<1x1x32xf32> to vector<2x8x32xf32>
    %73 = arith.mulf %39, %72 : vector<2x8x32xf32>
    "tpu.trace_start"() <{level = 10 : i32, message = "bqd,bkd->bqk"}> : () -> ()
    %cst_22 = arith.constant dense<0.000000e+00> : vector<2x8x8xf32>
    %74 = tpu.matmul %37, %73, %cst_22 {dimension_numbers = #tpu.dot_dimension_numbers<[2], [2], [1], [1], [0, 0, 0, 1, 1, 1], [0], [0]>} : vector<2x8x32xf32>, vector<2x8x32xf32>, vector<2x8x8xf32> -> vector<2x8x8xf32>
    "tpu.trace_stop"() : () -> ()
    %cst_23 = arith.constant 0.353553385 : f32
    %75 = vector.broadcast %cst_23 : f32 to vector<2x8x8xf32>
    %76 = arith.mulf %74, %75 : vector<2x8x8xf32>
    %77 = arith.addf %76, %42 : vector<2x8x8xf32>
    %cst_24 = arith.constant dense<0xFF800000> : vector<2x8xf32>
    %78 = vector.multi_reduction <maximumf>, %77, %cst_24 [2] : vector<2x8x8xf32> to vector<2x8xf32>
    %79 = vector.shape_cast %78 : vector<2x8xf32> to vector<2x8x1xf32>
    %80 = vector.broadcast %79 : vector<2x8x1xf32> to vector<2x8x8xf32>
    %81 = arith.subf %77, %80 : vector<2x8x8xf32>
    %82 = math.exp %81 : vector<2x8x8xf32>
    %cst_25 = arith.constant dense<0.000000e+00> : vector<2x8xf32>
    %83 = vector.multi_reduction <add>, %82, %cst_25 [2] : vector<2x8x8xf32> to vector<2x8xf32>
    %84 = vector.shape_cast %83 : vector<2x8xf32> to vector<2x8x1xf32>
    %85 = tpu.reciprocal %84 {approx = true} : vector<2x8x1xf32> -> vector<2x8x1xf32>
    %86 = arith.mulf %84, %85 : vector<2x8x1xf32>
    %cst_26 = arith.constant 2.000000e+00 : f32
    %87 = vector.broadcast %cst_26 : f32 to vector<2x8x1xf32>
    %88 = arith.subf %87, %86 : vector<2x8x1xf32>
    %89 = arith.mulf %85, %88 : vector<2x8x1xf32>
    %90 = vector.broadcast %89 : vector<2x8x1xf32> to vector<2x8x8xf32>
    %91 = arith.mulf %82, %90 : vector<2x8x8xf32>
    %92 = vector.broadcast %71 : vector<1x1x32xf32> to vector<2x8x32xf32>
    %93 = arith.mulf %41, %92 : vector<2x8x32xf32>
    "tpu.trace_start"() <{level = 10 : i32, message = "bqk,bkd->bqd"}> : () -> ()
    %cst_27 = arith.constant dense<0.000000e+00> : vector<2x8x32xf32>
    %94 = tpu.matmul %91, %93, %cst_27 {dimension_numbers = #tpu.dot_dimension_numbers<[2], [1], [1], [2], [0, 0, 0, 1, 1, 2], [0], [0]>} : vector<2x8x8xf32>, vector<2x8x32xf32>, vector<2x8x32xf32> -> vector<2x8x32xf32>
    "tpu.trace_stop"() : () -> ()
    %95 = arith.addf %69, %94 : vector<2x8x32xf32>
    %96 = vector.extract_strided_slice %8 {offsets = [2, 0], sizes = [1, 32], strides = [1, 1]} : vector<4x32xf32> to vector<1x32xf32>
    %97 = vector.shape_cast %96 : vector<1x32xf32> to vector<1x1x32xf32>
    %98 = vector.broadcast %97 : vector<1x1x32xf32> to vector<2x8x32xf32>
    %99 = arith.mulf %39, %98 : vector<2x8x32xf32>
    "tpu.trace_start"() <{level = 10 : i32, message = "bqd,bkd->bqk"}> : () -> ()
    %cst_28 = arith.constant dense<0.000000e+00> : vector<2x8x8xf32>
    %100 = tpu.matmul %37, %99, %cst_28 {dimension_numbers = #tpu.dot_dimension_numbers<[2], [2], [1], [1], [0, 0, 0, 1, 1, 1], [0], [0]>} : vector<2x8x32xf32>, vector<2x8x32xf32>, vector<2x8x8xf32> -> vector<2x8x8xf32>
    "tpu.trace_stop"() : () -> ()
    %cst_29 = arith.constant 0.353553385 : f32
    %101 = vector.broadcast %cst_29 : f32 to vector<2x8x8xf32>
    %102 = arith.mulf %100, %101 : vector<2x8x8xf32>
    %103 = arith.addf %102, %42 : vector<2x8x8xf32>
    %cst_30 = arith.constant dense<0xFF800000> : vector<2x8xf32>
    %104 = vector.multi_reduction <maximumf>, %103, %cst_30 [2] : vector<2x8x8xf32> to vector<2x8xf32>
    %105 = vector.shape_cast %104 : vector<2x8xf32> to vector<2x8x1xf32>
    %106 = vector.broadcast %105 : vector<2x8x1xf32> to vector<2x8x8xf32>
    %107 = arith.subf %103, %106 : vector<2x8x8xf32>
    %108 = math.exp %107 : vector<2x8x8xf32>
    %cst_31 = arith.constant dense<0.000000e+00> : vector<2x8xf32>
    %109 = vector.multi_reduction <add>, %108, %cst_31 [2] : vector<2x8x8xf32> to vector<2x8xf32>
    %110 = vector.shape_cast %109 : vector<2x8xf32> to vector<2x8x1xf32>
    %111 = tpu.reciprocal %110 {approx = true} : vector<2x8x1xf32> -> vector<2x8x1xf32>
    %112 = arith.mulf %110, %111 : vector<2x8x1xf32>
    %cst_32 = arith.constant 2.000000e+00 : f32
    %113 = vector.broadcast %cst_32 : f32 to vector<2x8x1xf32>
    %114 = arith.subf %113, %112 : vector<2x8x1xf32>
    %115 = arith.mulf %111, %114 : vector<2x8x1xf32>
    %116 = vector.broadcast %115 : vector<2x8x1xf32> to vector<2x8x8xf32>
    %117 = arith.mulf %108, %116 : vector<2x8x8xf32>
    %118 = vector.broadcast %97 : vector<1x1x32xf32> to vector<2x8x32xf32>
    %119 = arith.mulf %41, %118 : vector<2x8x32xf32>
    "tpu.trace_start"() <{level = 10 : i32, message = "bqk,bkd->bqd"}> : () -> ()
    %cst_33 = arith.constant dense<0.000000e+00> : vector<2x8x32xf32>
    %120 = tpu.matmul %117, %119, %cst_33 {dimension_numbers = #tpu.dot_dimension_numbers<[2], [1], [1], [2], [0, 0, 0, 1, 1, 2], [0], [0]>} : vector<2x8x8xf32>, vector<2x8x32xf32>, vector<2x8x32xf32> -> vector<2x8x32xf32>
    "tpu.trace_stop"() : () -> ()
    %121 = arith.addf %95, %120 : vector<2x8x32xf32>
    %122 = vector.extract_strided_slice %8 {offsets = [3, 0], sizes = [1, 32], strides = [1, 1]} : vector<4x32xf32> to vector<1x32xf32>
    %123 = vector.shape_cast %122 : vector<1x32xf32> to vector<1x1x32xf32>
    %124 = vector.broadcast %123 : vector<1x1x32xf32> to vector<2x8x32xf32>
    %125 = arith.mulf %39, %124 : vector<2x8x32xf32>
    "tpu.trace_start"() <{level = 10 : i32, message = "bqd,bkd->bqk"}> : () -> ()
    %cst_34 = arith.constant dense<0.000000e+00> : vector<2x8x8xf32>
    %126 = tpu.matmul %37, %125, %cst_34 {dimension_numbers = #tpu.dot_dimension_numbers<[2], [2], [1], [1], [0, 0, 0, 1, 1, 1], [0], [0]>} : vector<2x8x32xf32>, vector<2x8x32xf32>, vector<2x8x8xf32> -> vector<2x8x8xf32>
    "tpu.trace_stop"() : () -> ()
    %cst_35 = arith.constant 0.353553385 : f32
    %127 = vector.broadcast %cst_35 : f32 to vector<2x8x8xf32>
    %128 = arith.mulf %126, %127 : vector<2x8x8xf32>
    %129 = arith.addf %128, %42 : vector<2x8x8xf32>
    %cst_36 = arith.constant dense<0xFF800000> : vector<2x8xf32>
    %130 = vector.multi_reduction <maximumf>, %129, %cst_36 [2] : vector<2x8x8xf32> to vector<2x8xf32>
    %131 = vector.shape_cast %130 : vector<2x8xf32> to vector<2x8x1xf32>
    %132 = vector.broadcast %131 : vector<2x8x1xf32> to vector<2x8x8xf32>
    %133 = arith.subf %129, %132 : vector<2x8x8xf32>
    %134 = math.exp %133 : vector<2x8x8xf32>
    %cst_37 = arith.constant dense<0.000000e+00> : vector<2x8xf32>
    %135 = vector.multi_reduction <add>, %134, %cst_37 [2] : vector<2x8x8xf32> to vector<2x8xf32>
    %136 = vector.shape_cast %135 : vector<2x8xf32> to vector<2x8x1xf32>
    %137 = tpu.reciprocal %136 {approx = true} : vector<2x8x1xf32> -> vector<2x8x1xf32>
    %138 = arith.mulf %136, %137 : vector<2x8x1xf32>
    %cst_38 = arith.constant 2.000000e+00 : f32
    %139 = vector.broadcast %cst_38 : f32 to vector<2x8x1xf32>
    %140 = arith.subf %139, %138 : vector<2x8x1xf32>
    %141 = arith.mulf %137, %140 : vector<2x8x1xf32>
    %142 = vector.broadcast %141 : vector<2x8x1xf32> to vector<2x8x8xf32>
    %143 = arith.mulf %134, %142 : vector<2x8x8xf32>
    %144 = vector.broadcast %123 : vector<1x1x32xf32> to vector<2x8x32xf32>
    %145 = arith.mulf %41, %144 : vector<2x8x32xf32>
    "tpu.trace_start"() <{level = 10 : i32, message = "bqk,bkd->bqd"}> : () -> ()
    %cst_39 = arith.constant dense<0.000000e+00> : vector<2x8x32xf32>
    %146 = tpu.matmul %143, %145, %cst_39 {dimension_numbers = #tpu.dot_dimension_numbers<[2], [1], [1], [2], [0, 0, 0, 1, 1, 2], [0], [0]>} : vector<2x8x8xf32>, vector<2x8x32xf32>, vector<2x8x32xf32> -> vector<2x8x32xf32>
    "tpu.trace_stop"() : () -> ()
    %147 = arith.addf %121, %146 : vector<2x8x32xf32>
    %148 = vector.shape_cast %147 : vector<2x8x32xf32> to vector<16x32xf32>
    %c0_40 = arith.constant 0 : index
    %c0_41 = arith.constant 0 : index
    %149 = vector.load %arg4[%c0_40, %c0_41] : memref<32x32xf32, #tpu.memory_space<vmem>>, vector<32x32xf32>
    %cst_42 = arith.constant dense<0.000000e+00> : vector<16x32xf32>
    %150 = tpu.matmul %148, %149, %cst_42 {dimension_numbers = #tpu.dot_dimension_numbers<[1], [0], [0], [1], [0, 0, 1, 1], [], []>} : vector<16x32xf32>, vector<32x32xf32>, vector<16x32xf32> -> vector<16x32xf32>
    %151 = vector.broadcast %6 : vector<1x32xf32> to vector<16x32xf32>
    %152 = arith.addf %150, %151 : vector<16x32xf32>
    %153 = arith.addf %0, %152 : vector<16x32xf32>
    %cst_43 = arith.constant dense<0.000000e+00> : vector<16xf32>
    %154 = vector.multi_reduction <add>, %153, %cst_43 [1] : vector<16x32xf32> to vector<16xf32>
    %155 = vector.shape_cast %154 : vector<16xf32> to vector<16x1xf32>
    %cst_44 = arith.constant 3.200000e+01 : f32
    %156 = vector.broadcast %cst_44 : f32 to vector<16x1xf32>
    %157 = arith.divf %155, %156 : vector<16x1xf32>
    %158 = vector.broadcast %157 : vector<16x1xf32> to vector<16x32xf32>
    %159 = arith.subf %153, %158 : vector<16x32xf32>
    %160 = arith.mulf %159, %159 : vector<16x32xf32>
    %cst_45 = arith.constant dense<0.000000e+00> : vector<16xf32>
    %161 = vector.multi_reduction <add>, %160, %cst_45 [1] : vector<16x32xf32> to vector<16xf32>
    %162 = vector.shape_cast %161 : vector<16xf32> to vector<16x1xf32>
    %cst_46 = arith.constant 3.200000e+01 : f32
    %163 = vector.broadcast %cst_46 : f32 to vector<16x1xf32>
    %164 = arith.divf %162, %163 : vector<16x1xf32>
    %165 = vector.broadcast %157 : vector<16x1xf32> to vector<16x32xf32>
    %166 = arith.subf %153, %165 : vector<16x32xf32>
    %cst_47 = arith.constant 9.99999974E-6 : f32
    %167 = vector.broadcast %cst_47 : f32 to vector<16x1xf32>
    %168 = arith.addf %164, %167 : vector<16x1xf32>
    %169 = math.rsqrt %168 : vector<16x1xf32>
    %170 = vector.broadcast %169 : vector<16x1xf32> to vector<16x32xf32>
    %171 = arith.mulf %166, %170 : vector<16x32xf32>
    %172 = vector.broadcast %4 : vector<1x32xf32> to vector<16x32xf32>
    %173 = arith.mulf %171, %172 : vector<16x32xf32>
    %174 = vector.broadcast %5 : vector<1x32xf32> to vector<16x32xf32>
    %175 = arith.addf %173, %174 : vector<16x32xf32>
    %c0_48 = arith.constant 0 : index
    %c0_49 = arith.constant 0 : index
    %176 = vector.load %arg5[%c0_48, %c0_49] : memref<32x128xf32, #tpu.memory_space<vmem>>, vector<32x128xf32>
    %cst_50 = arith.constant dense<0.000000e+00> : vector<16x128xf32>
    %177 = tpu.matmul %175, %176, %cst_50 {dimension_numbers = #tpu.dot_dimension_numbers<[1], [0], [0], [1], [0, 0, 1, 1], [], []>} : vector<16x32xf32>, vector<32x128xf32>, vector<16x128xf32> -> vector<16x128xf32>
    %c0_51 = arith.constant 0 : index
    %c0_52 = arith.constant 0 : index
    %178 = vector.load %arg6[%c0_51, %c0_52] : memref<1x128xf32, #tpu.memory_space<vmem>>, vector<1x128xf32>
    %179 = vector.broadcast %178 : vector<1x128xf32> to vector<16x128xf32>
    %180 = arith.addf %177, %179 : vector<16x128xf32>
    %cst_53 = arith.constant 5.000000e-01 : f32
    %181 = vector.broadcast %cst_53 : f32 to vector<16x128xf32>
    %182 = arith.mulf %181, %180 : vector<16x128xf32>
    %cst_54 = arith.constant 0.707106769 : f32
    %183 = vector.broadcast %cst_54 : f32 to vector<16x128xf32>
    %184 = arith.mulf %180, %183 : vector<16x128xf32>
    %185 = math.erf %184 : vector<16x128xf32>
    %cst_55 = arith.constant 1.000000e+00 : f32
    %186 = vector.broadcast %cst_55 : f32 to vector<16x128xf32>
    %187 = arith.addf %186, %185 : vector<16x128xf32>
    %188 = arith.mulf %182, %187 : vector<16x128xf32>
    %c0_56 = arith.constant 0 : index
    %c0_57 = arith.constant 0 : index
    %189 = vector.load %arg7[%c0_56, %c0_57] : memref<128x32xf32, #tpu.memory_space<vmem>>, vector<128x32xf32>
    %cst_58 = arith.constant dense<0.000000e+00> : vector<16x32xf32>
    %190 = tpu.matmul %188, %189, %cst_58 {dimension_numbers = #tpu.dot_dimension_numbers<[1], [0], [0], [1], [0, 0, 1, 1], [], []>} : vector<16x128xf32>, vector<128x32xf32>, vector<16x32xf32> -> vector<16x32xf32>
    %191 = vector.broadcast %7 : vector<1x32xf32> to vector<16x32xf32>
    %192 = arith.addf %190, %191 : vector<16x32xf32>
    %193 = arith.addf %153, %192 : vector<16x32xf32>
    %c0_59 = arith.constant 0 : index
    %c0_60 = arith.constant 0 : index
    %194 = vector.load %arg9[%c0_59, %c0_60] : memref<16x32xf32, #tpu.memory_space<vmem>>, vector<16x32xf32>
    tpu.vector_store %arg9[%c0_59, %c0_60], %193 {strides = array<i32>} : memref<16x32xf32, #tpu.memory_space<vmem>>, vector<16x32xf32>,
    return
  }
}

</mosaic_0001>

<llo_original>
// kernel: tpu_custom_call.1
$region0: #{tpu_custom_call.1}
  #allocation0 [shape = 'u32[]', space=smem, size = 0x4, offset = 0x4, fixed_abs, tag = 'smem constant byte address 0x4 - core index']
  #allocation1 [shape = 'u32[72,128]{1,0:T(1,128)}', space=vmem, size = 0x9000, scoped, tag = 'internal scratch']
  %s0 = inlined_call_operand.vmem [shape: f32[16,32], index: 0, kind: input, shape index: {}]
  %s1 = inlined_call_operand.vmem [shape: f32[2,8,8], index: 1, kind: input, shape index: {}]
  %s2 = inlined_call_operand.vmem [shape: f32[32,96], index: 2, kind: input, shape index: {}]
  %s3 = inlined_call_operand.vmem [shape: f32[1,96], index: 3, kind: input, shape index: {}]
  %s4 = inlined_call_operand.vmem [shape: f32[32,32], index: 4, kind: input, shape index: {}]
  %s5 = inlined_call_operand.vmem [shape: f32[32,128], index: 5, kind: input, shape index: {}]
  %s6 = inlined_call_operand.vmem [shape: f32[1,128], index: 6, kind: input, shape index: {}]
  %s7 = inlined_call_operand.vmem [shape: f32[128,32], index: 7, kind: input, shape index: {}]
  %s8 = inlined_call_operand.vmem [shape: f32[10,32], index: 8, kind: input, shape index: {}]
  %s9 = inlined_call_operand.hbm [shape: f32[16,32], index: 9, kind: output, shape index: {}]
  %s10 = sld [smem:[#allocation0]]
  $region46: #{tpu_custom_call.1} parent=0
    _
  %s12 = ssub.s32 1, %s10
  %s13 = scalar_select 0, %s12, %s10
  $region1: #{tpu_custom_call.1} parent=0
    #allocation2 [shape = 'u8[8192]{0}', space=vmem, size = 0x2000, scoped, tag = 'output window, operand 0, single buffered']
    #allocation3 [shape = 's32[1]{0}', space=sflag, size = 0x4, scoped, tag = 'scoped memory for tpu_custom_call.1']
    %14 = vsyncpa [#allocation3], 0
    // Predicated region
    $region2: #{tpu_custom_call.1} parent=1 // pred_check
      _
    $region3: #{tpu_custom_call.1} parent=1 // pred_check_branch
      %16 = sbr.rel (0) target = $region5
    $region4: #{tpu_custom_call.1} parent=1 // pred_region
      _
    $region5: #{tpu_custom_call.1} parent=1 // pred_fallthru
      _
    // Predicated region
    $region6: #{tpu_custom_call.1} parent=1 // pred_check
      _
    $region7: #{tpu_custom_call.1} parent=1 // pred_check_branch
      %18 = sbr.rel (0) target = $region9
    $region8: #{tpu_custom_call.1} parent=1 // pred_region
      _
    $region9: #{tpu_custom_call.1} parent=1 // pred_fallthru
      _
    // Predicated region
    $region10: #{tpu_custom_call.1} parent=1 // pred_check
      _
    $region11: #{tpu_custom_call.1} parent=1 // pred_check_branch
      %20 = sbr.rel (0) target = $region13
    $region12: #{tpu_custom_call.1} parent=1 // pred_region
      _
    $region13: #{tpu_custom_call.1} parent=1 // pred_fallthru
      _
    // Predicated region
    $region14: #{tpu_custom_call.1} parent=1 // pred_check
      _
    $region15: #{tpu_custom_call.1} parent=1 // pred_check_branch
      %22 = sbr.rel (0) target = $region17
    $region16: #{tpu_custom_call.1} parent=1 // pred_region
      _
    $region17: #{tpu_custom_call.1} parent=1 // pred_fallthru
      _
    // Predicated region
    $region18: #{tpu_custom_call.1} parent=1 // pred_check
      _
    $region19: #{tpu_custom_call.1} parent=1 // pred_check_branch
      %24 = sbr.rel (0) target = $region21
    $region20: #{tpu_custom_call.1} parent=1 // pred_region
      _
    $region21: #{tpu_custom_call.1} parent=1 // pred_fallthru
      _
    // Predicated region
    $region22: #{tpu_custom_call.1} parent=1 // pred_check
      _
    $region23: #{tpu_custom_call.1} parent=1 // pred_check_branch
      %26 = sbr.rel (0) target = $region25
    $region24: #{tpu_custom_call.1} parent=1 // pred_region
      _
    $region25: #{tpu_custom_call.1} parent=1 // pred_fallthru
      _
    // Predicated region
    $region26: #{tpu_custom_call.1} parent=1 // pred_check
      _
    $region27: #{tpu_custom_call.1} parent=1 // pred_check_branch
      %28 = sbr.rel (0) target = $region29
    $region28: #{tpu_custom_call.1} parent=1 // pred_region
      _
    $region29: #{tpu_custom_call.1} parent=1 // pred_fallthru
      _
    // Predicated region
    $region30: #{tpu_custom_call.1} parent=1 // pred_check
      _
    $region31: #{tpu_custom_call.1} parent=1 // pred_check_branch
      %30 = sbr.rel (0) target = $region33
    $region32: #{tpu_custom_call.1} parent=1 // pred_region
      _
    $region33: #{tpu_custom_call.1} parent=1 // pred_fallthru
      _
    // Predicated region
    $region34: #{tpu_custom_call.1} parent=1 // pred_check
      _
    $region35: #{tpu_custom_call.1} parent=1 // pred_check_branch
      %32 = sbr.rel (0) target = $region37
    $region36: #{tpu_custom_call.1} parent=1 // pred_region
      _
    $region37: #{tpu_custom_call.1} parent=1 // pred_fallthru
      _
    %v33 = vld [vmem:[%s0] sm:$0xff]
    %v34 = vld [vmem:[%s0 + $0x8] sm:$0xff]
    %v35 = vld [vmem:[%s8] sm:$0xff]
    %v36 = vld [vmem:[%s8 + $0x8] sm:$0x3]
    %vm37 = vcmask 261120
    %v38 = vsel %vm37, %v33, 0.0
    %39 = vadd.xlane.f32.xlu0 %v38
    %v40 = vpop.xlane.xlu0 %39
    %v41 = vsel %vm37, %v34, 0.0
    %42 = vadd.xlane.f32.xlu0 %v41
    %v43 = vpop.xlane.xlu0 %42
    %v44 = vrcp.pop 32.0
    %v45 = vmul.f32 32.0, %v44
    %v46 = vsub.f32 1.0, %v45
    %v47 = vmul.f32 %v44, %v46
    %v48 = vadd.f32 %v44, %v47
    %vm49 = vweird.f32 %v44
    %v50 = vsel %vm49, %v44, %v48
    %v51 = vmul.f32 %v40, %v50
    %v52 = vmul.f32 %v43, %v50
    %v53 = vsub.f32 %v33, %v51
    %v54 = vsub.f32 %v34, %v52
    %v55 = vmul.f32 %v53, %v53
    %v56 = vmul.f32 %v54, %v54
    %v57 = vsel %vm37, %v55, 0.0
    %58 = vadd.xlane.f32.xlu0 %v57
    %v59 = vpop.xlane.xlu0 %58
    %v60 = vsel %vm37, %v56, 0.0
    %61 = vadd.xlane.f32.xlu0 %v60
    %v62 = vpop.xlane.xlu0 %61
    %v63 = vmul.f32 %v59, %v50
    %v64 = vmul.f32 %v62, %v50
    %v65 = vadd.f32 %v63, 1e-05
    %v66 = vadd.f32 %v64, 1e-05
    %v67 = vrsqrt.pop %v65
    %v68 = vmul.f32 %v67, %v65
    %v69 = vmul.f32 %v68, %v67
    %v70 = vmul.f32 0.5, %v69
    %v71 = vsub.f32 1.5, %v70
    %v72 = vmul.f32 %v67, %v71
    %vm73 = vweird.f32 %v65
    %vm74 = vweird.f32 %v67
    %vm75 = vmor %vm73, %vm74
    %v76 = vsel %vm75, %v67, %v72
    %v77 = vrsqrt.pop %v66
    %v78 = vmul.f32 %v77, %v66
    %v79 = vmul.f32 %v78, %v77
    %v80 = vmul.f32 0.5, %v79
    %v81 = vsub.f32 1.5, %v80
    %v82 = vmul.f32 %v77, %v81
    %vm83 = vweird.f32 %v66
    %vm84 = vweird.f32 %v77
    %vm85 = vmor %vm83, %vm84
    %v86 = vsel %vm85, %v77, %v82
    %v87 = vmul.f32 %v53, %v76
    %v88 = vmul.f32 %v54, %v86
    %v89 = vperm.slane %v35, 0
    %v90 = vmul.f32 %v87, %v89
    %v91 = vmul.f32 %v88, %v89
    %v92 = vperm.slane %v35, 1
    %v93 = vadd.f32 %v90, %v92
    %v94 = vadd.f32 %v91, %v92
    %v95 = vld [vmem:[%s2] sm:$0xff]
    %v96 = vld [vmem:[%s2 + $0x8] sm:$0xff]
    %v97 = vld [vmem:[%s2 + $0x10] sm:$0xff]
    %v98 = vld [vmem:[%s2 + $0x18] sm:$0xff]
    %v99 = vld [vmem:[%s3] sm:$0x1]
    %v101 = vperm.slane %v99, 0
    %v104 = vsel %vm37, %v93, 0
    %v107 = vsel %vm37, %v94, 0
    %109 = vmatpush.msra.mxu0 0.0
    %110 = vmatpush.msra.mxu0 0.0
    %111 = vmatpush.msra.mxu0 0.0
    %112 = vmatpush.msra.mxu0 0.0
    %113 = vmatpush.msra.mxu0 0.0
    %114 = vmatpush.msra.mxu0 0.0
    %115 = vmatpush.msra.mxu0 0.0
    %116 = vmatpush.msra.mxu0 0.0
    %117 = vmatpush.msra.mxu0 0.0
    %118 = vmatpush.msra.mxu0 0.0
    %119 = vmatpush.msra.mxu0 0.0
    %120 = vmatpush.msra.mxu0 0.0
    %121 = vmatpush.msra.mxu0 %v98
    %122 = vmatpush.msra.mxu0 %v97
    %123 = vmatpush.msra.mxu0 %v96
    %124 = vmatpush.msra.mxu0 %v95
    %125 = vmatmul.f32.gmra.mxu0 %v104
    %v126 = vpop.f32.mrf.mxu0
    %v127 = vadd.f32 %v101, %v126
    %128 = vmatmul.f32.gmra.mxu0 %v107
    %v129 = vpop.f32.mrf.mxu0
    %v130 = vadd.f32 %v101, %v129
    %131 = vdwg.mxu0
    %v132 = vld [vmem:[%s1] sm:$0xff]
    %v133 = vld [vmem:[%s1 + $0x8] sm:$0xff]
    %v134 = vperm.slane %v35, 6
    %136 = vrot.lane.b32.xlu0 %v134, 32
    %v137 = vpop.permute.xlu0 %136
    %v139 = vmul.f32 %v127, %v137
    %v140 = vmul.f32 %v130, %v137
    %142 = vrot.lane.b32.xlu0 %v139, 96
    %v143 = vpop.permute.xlu0 %142
    %v145 = vsel %vm37, %v127, 0
    %v147 = vsel %vm37, %v143, 0
    %149 = vmatpush.xpose.msra.mxu0 0.0
    %150 = vmatpush.xpose.msra.mxu0 0.0
    %151 = vmatpush.xpose.msra.mxu0 0.0
    %152 = vmatpush.xpose.msra.mxu0 0.0
    %153 = vmatpush.xpose.msra.mxu0 0.0
    %154 = vmatpush.xpose.msra.mxu0 0.0
    %155 = vmatpush.xpose.msra.mxu0 0.0
    %156 = vmatpush.xpose.msra.mxu0 0.0
    %157 = vmatpush.xpose.msra.mxu0 0.0
    %158 = vmatpush.xpose.msra.mxu0 0.0
    %159 = vmatpush.xpose.msra.mxu0 0.0
    %160 = vmatpush.xpose.msra.mxu0 0.0
    %161 = vmatpush.xpose.msra.mxu0 0.0
    %162 = vmatpush.xpose.msra.mxu0 0.0
    %163 = vmatpush.xpose.msra.mxu0 0.0
    %164 = vmatpush.xpose.msra.mxu0 %v147
    %165 = vmatmul.f32.gmra.mxu0 %v145
    %v166 = vpop.f32.mrf.mxu0
    %v167 = vadd.f32 0.0, %v166
    %168 = vdwg.mxu0
    %170 = vrot.lane.b32.xlu0 %v140, 96
    %v171 = vpop.permute.xlu0 %170
    %v173 = vsel %vm37, %v130, 0
    %v175 = vsel %vm37, %v171, 0
    %177 = vmatpush.xpose.msra.mxu0 0.0
    %178 = vmatpush.xpose.msra.mxu0 0.0
    %179 = vmatpush.xpose.msra.mxu0 0.0
    %180 = vmatpush.xpose.msra.mxu0 0.0
    %181 = vmatpush.xpose.msra.mxu0 0.0
    %182 = vmatpush.xpose.msra.mxu0 0.0
    %183 = vmatpush.xpose.msra.mxu0 0.0
    %184 = vmatpush.xpose.msra.mxu0 0.0
    %185 = vmatpush.xpose.msra.mxu0 0.0
    %186 = vmatpush.xpose.msra.mxu0 0.0
    %187 = vmatpush.xpose.msra.mxu0 0.0
    %188 = vmatpush.xpose.msra.mxu0 0.0
    %189 = vmatpush.xpose.msra.mxu0 0.0
    %190 = vmatpush.xpose.msra.mxu0 0.0
    %191 = vmatpush.xpose.msra.mxu0 0.0
    %192 = vmatpush.xpose.msra.mxu0 %v175
    %193 = vmatmul.f32.gmra.mxu0 %v173
    %v194 = vpop.f32.mrf.mxu0
    %v195 = vadd.f32 0.0, %v194
    %196 = vdwg.mxu0
    %v197 = vmul.f32 %v167, 0.35355338
    %v198 = vmul.f32 %v195, 0.35355338
    %v199 = vadd.f32 %v197, %v132
    %v200 = vadd.f32 %v198, %v133
    %vm201 = vcmask 64512
    %v202 = vsel %vm201, %v199, -inf
    %203 = vmax.xlane.f32.xlu0 %v202
    %v204 = vpop.xlane.xlu0 %203
    %v205 = vsel %vm201, %v200, -inf
    %206 = vmax.xlane.f32.xlu0 %v205
    %v207 = vpop.xlane.xlu0 %206
    %v208 = vsub.f32 %v199, %v204
    %v209 = vsub.f32 %v200, %v207
    %v210 = vmul.f32 %v208, 1.442695
    %v211 = vpow.pop %v210
    %v212 = vmul.f32 %v209, 1.442695
    %v213 = vpow.pop %v212
    %v214 = vsel %vm201, %v211, 0.0
    %215 = vadd.xlane.f32.xlu0 %v214
    %v216 = vpop.xlane.xlu0 %215
    %v217 = vsel %vm201, %v213, 0.0
    %218 = vadd.xlane.f32.xlu0 %v217
    %v219 = vpop.xlane.xlu0 %218
    %v220 = vrcp.pop %v216
    %v221 = vrcp.pop %v219
    %v222 = vmul.f32 %v216, %v220
    %v223 = vmul.f32 %v219, %v221
    %v224 = vsub.f32 2.0, %v222
    %v225 = vsub.f32 2.0, %v223
    %v226 = vmul.f32 %v220, %v224
    %v227 = vmul.f32 %v221, %v225
    %v228 = vmul.f32 %v211, %v226
    %v229 = vmul.f32 %v213, %v227
    %230 = vrot.lane.b32.xlu0 %v134, 64
    %v231 = vpop.permute.xlu0 %230
    %v233 = vmul.f32 %v127, %v231
    %v234 = vmul.f32 %v130, %v231
    %v235 = vperm.slane %v35, 7
    %237 = vrot.lane.b32.xlu0 %v235, 32
    %v238 = vpop.permute.xlu0 %237
    %v240 = vmul.f32 %v127, %v238
    %v241 = vmul.f32 %v130, %v238
    %243 = vrot.lane.b32.xlu0 %v240, 96
    %v244 = vpop.permute.xlu0 %243
    %v245 = vsel %vm37, %v244, 0
    %247 = vmatpush.xpose.msra.mxu0 0.0
    %248 = vmatpush.xpose.msra.mxu0 0.0
    %249 = vmatpush.xpose.msra.mxu0 0.0
    %250 = vmatpush.xpose.msra.mxu0 0.0
    %251 = vmatpush.xpose.msra.mxu0 0.0
    %252 = vmatpush.xpose.msra.mxu0 0.0
    %253 = vmatpush.xpose.msra.mxu0 0.0
    %254 = vmatpush.xpose.msra.mxu0 0.0
    %255 = vmatpush.xpose.msra.mxu0 0.0
    %256 = vmatpush.xpose.msra.mxu0 0.0
    %257 = vmatpush.xpose.msra.mxu0 0.0
    %258 = vmatpush.xpose.msra.mxu0 0.0
    %259 = vmatpush.xpose.msra.mxu0 0.0
    %260 = vmatpush.xpose.msra.mxu0 0.0
    %261 = vmatpush.xpose.msra.mxu0 0.0
    %262 = vmatpush.xpose.msra.mxu0 %v245
    %263 = vmatmul.f32.gmra.mxu0 %v145
    %v264 = vpop.f32.mrf.mxu0
    %v265 = vadd.f32 0.0, %v264
    %266 = vdwg.mxu0
    %268 = vrot.lane.b32.xlu0 %v241, 96
    %v269 = vpop.permute.xlu0 %268
    %v270 = vsel %vm37, %v269, 0
    %272 = vmatpush.xpose.msra.mxu0 0.0
    %273 = vmatpush.xpose.msra.mxu0 0.0
    %274 = vmatpush.xpose.msra.mxu0 0.0
    %275 = vmatpush.xpose.msra.mxu0 0.0
    %276 = vmatpush.xpose.msra.mxu0 0.0
    %277 = vmatpush.xpose.msra.mxu0 0.0
    %278 = vmatpush.xpose.msra.mxu0 0.0
    %279 = vmatpush.xpose.msra.mxu0 0.0
    %280 = vmatpush.xpose.msra.mxu0 0.0
    %281 = vmatpush.xpose.msra.mxu0 0.0
    %282 = vmatpush.xpose.msra.mxu0 0.0
    %283 = vmatpush.xpose.msra.mxu0 0.0
    %284 = vmatpush.xpose.msra.mxu0 0.0
    %285 = vmatpush.xpose.msra.mxu0 0.0
    %286 = vmatpush.xpose.msra.mxu0 0.0
    %287 = vmatpush.xpose.msra.mxu0 %v270
    %288 = vmatmul.f32.gmra.mxu0 %v173
    %v289 = vpop.f32.mrf.mxu0
    %v290 = vadd.f32 0.0, %v289
    %291 = vdwg.mxu0
    %v292 = vmul.f32 %v265, 0.35355338
    %v293 = vmul.f32 %v290, 0.35355338
    %v294 = vadd.f32 %v292, %v132
    %v295 = vadd.f32 %v293, %v133
    %v296 = vsel %vm201, %v294, -inf
    %297 = vmax.xlane.f32.xlu0 %v296
    %v298 = vpop.xlane.xlu0 %297
    %v299 = vsel %vm201, %v295, -inf
    %300 = vmax.xlane.f32.xlu0 %v299
    %v301 = vpop.xlane.xlu0 %300
    %v302 = vsub.f32 %v294, %v298
    %v303 = vsub.f32 %v295, %v301
    %v304 = vmul.f32 %v302, 1.442695
    %v305 = vpow.pop %v304
    %v306 = vmul.f32 %v303, 1.442695
    %v307 = vpow.pop %v306
    %v308 = vsel %vm201, %v305, 0.0
    %309 = vadd.xlane.f32.xlu0 %v308
    %v310 = vpop.xlane.xlu0 %309
    %v311 = vsel %vm201, %v307, 0.0
    %312 = vadd.xlane.f32.xlu0 %v311
    %v313 = vpop.xlane.xlu0 %312
    %v314 = vrcp.pop %v310
    %v315 = vrcp.pop %v313
    %v316 = vmul.f32 %v310, %v314
    %v317 = vmul.f32 %v313, %v315
    %v318 = vsub.f32 2.0, %v316
    %v319 = vsub.f32 2.0, %v317
    %v320 = vmul.f32 %v314, %v318
    %v321 = vmul.f32 %v315, %v319
    %v322 = vmul.f32 %v305, %v320
    %v323 = vmul.f32 %v307, %v321
    %324 = vrot.lane.b32.xlu0 %v235, 64
    %v325 = vpop.permute.xlu0 %324
    %v327 = vmul.f32 %v127, %v325
    %v328 = vmul.f32 %v130, %v325
    %330 = vrot.lane.b32.xlu0 %v327, 64
    %v331 = vpop.permute.xlu0 %330
    %v334 = vsel %vm201, %v322, 0
    %336 = vmatpush.msra.mxu0 0.0
    %337 = vmatpush.msra.mxu0 0.0
    %338 = vmatpush.msra.mxu0 0.0
    %339 = vmatpush.msra.mxu0 0.0
    %340 = vmatpush.msra.mxu0 0.0
    %341 = vmatpush.msra.mxu0 0.0
    %342 = vmatpush.msra.mxu0 0.0
    %343 = vmatpush.msra.mxu0 0.0
    %344 = vmatpush.msra.mxu0 0.0
    %345 = vmatpush.msra.mxu0 0.0
    %346 = vmatpush.msra.mxu0 0.0
    %347 = vmatpush.msra.mxu0 0.0
    %348 = vmatpush.msra.mxu0 0.0
    %349 = vmatpush.msra.mxu0 0.0
    %350 = vmatpush.msra.mxu0 0.0
    %351 = vmatpush.msra.mxu0 %v331
    %352 = vmatmul.f32.gmra.mxu0 %v334
    %v353 = vpop.f32.mrf.mxu0
    %v354 = vadd.f32 0.0, %v353
    %355 = vdwg.mxu0
    %357 = vrot.lane.b32.xlu0 %v328, 64
    %v358 = vpop.permute.xlu0 %357
    %v361 = vsel %vm201, %v323, 0
    %363 = vmatpush.msra.mxu0 0.0
    %364 = vmatpush.msra.mxu0 0.0
    %365 = vmatpush.msra.mxu0 0.0
    %366 = vmatpush.msra.mxu0 0.0
    %367 = vmatpush.msra.mxu0 0.0
    %368 = vmatpush.msra.mxu0 0.0
    %369 = vmatpush.msra.mxu0 0.0
    %370 = vmatpush.msra.mxu0 0.0
    %371 = vmatpush.msra.mxu0 0.0
    %372 = vmatpush.msra.mxu0 0.0
    %373 = vmatpush.msra.mxu0 0.0
    %374 = vmatpush.msra.mxu0 0.0
    %375 = vmatpush.msra.mxu0 0.0
    %376 = vmatpush.msra.mxu0 0.0
    %377 = vmatpush.msra.mxu0 0.0
    %378 = vmatpush.msra.mxu0 %v358
    %379 = vmatmul.f32.gmra.mxu0 %v361
    %v380 = vpop.f32.mrf.mxu0
    %v381 = vadd.f32 0.0, %v380
    %382 = vdwg.mxu0
    %384 = vrot.lane.b32.xlu0 %v233, 64
    %v385 = vpop.permute.xlu0 %384
    %v388 = vsel %vm201, %v228, 0
    %390 = vmatpush.msra.mxu0 0.0
    %391 = vmatpush.msra.mxu0 0.0
    %392 = vmatpush.msra.mxu0 0.0
    %393 = vmatpush.msra.mxu0 0.0
    %394 = vmatpush.msra.mxu0 0.0
    %395 = vmatpush.msra.mxu0 0.0
    %396 = vmatpush.msra.mxu0 0.0
    %397 = vmatpush.msra.mxu0 0.0
    %398 = vmatpush.msra.mxu0 0.0
    %399 = vmatpush.msra.mxu0 0.0
    %400 = vmatpush.msra.mxu0 0.0
    %401 = vmatpush.msra.mxu0 0.0
    %402 = vmatpush.msra.mxu0 0.0
    %403 = vmatpush.msra.mxu0 0.0
    %404 = vmatpush.msra.mxu0 0.0
    %405 = vmatpush.msra.mxu0 %v385
    %406 = vmatmul.f32.gmra.mxu0 %v388
    %v407 = vpop.f32.mrf.mxu0
    %v408 = vadd.f32 %v354, %v407
    %409 = vdwg.mxu0
    %411 = vrot.lane.b32.xlu0 %v234, 64
    %v412 = vpop.permute.xlu0 %411
    %v415 = vsel %vm201, %v229, 0
    %417 = vmatpush.msra.mxu0 0.0
    %418 = vmatpush.msra.mxu0 0.0
    %419 = vmatpush.msra.mxu0 0.0
    %420 = vmatpush.msra.mxu0 0.0
    %421 = vmatpush.msra.mxu0 0.0
    %422 = vmatpush.msra.mxu0 0.0
    %423 = vmatpush.msra.mxu0 0.0
    %424 = vmatpush.msra.mxu0 0.0
    %425 = vmatpush.msra.mxu0 0.0
    %426 = vmatpush.msra.mxu0 0.0
    %427 = vmatpush.msra.mxu0 0.0
    %428 = vmatpush.msra.mxu0 0.0
    %429 = vmatpush.msra.mxu0 0.0
    %430 = vmatpush.msra.mxu0 0.0
    %431 = vmatpush.msra.mxu0 0.0
    %432 = vmatpush.msra.mxu0 %v412
    %433 = vmatmul.f32.gmra.mxu0 %v415
    %v434 = vpop.f32.mrf.mxu0
    %v435 = vadd.f32 %v381, %v434
    %436 = vdwg.mxu0
    %v437 = vperm.slane %v36, 0
    %439 = vrot.lane.b32.xlu0 %v437, 32
    %v440 = vpop.permute.xlu0 %439
    %v442 = vmul.f32 %v127, %v440
    %v443 = vmul.f32 %v130, %v440
    %445 = vrot.lane.b32.xlu0 %v442, 96
    %v446 = vpop.permute.xlu0 %445
    %v447 = vsel %vm37, %v446, 0
    %449 = vmatpush.xpose.msra.mxu0 0.0
    %450 = vmatpush.xpose.msra.mxu0 0.0
    %451 = vmatpush.xpose.msra.mxu0 0.0
    %452 = vmatpush.xpose.msra.mxu0 0.0
    %453 = vmatpush.xpose.msra.mxu0 0.0
    %454 = vmatpush.xpose.msra.mxu0 0.0
    %455 = vmatpush.xpose.msra.mxu0 0.0
    %456 = vmatpush.xpose.msra.mxu0 0.0
    %457 = vmatpush.xpose.msra.mxu0 0.0
    %458 = vmatpush.xpose.msra.mxu0 0.0
    %459 = vmatpush.xpose.msra.mxu0 0.0
    %460 = vmatpush.xpose.msra.mxu0 0.0
    %461 = vmatpush.xpose.msra.mxu0 0.0
    %462 = vmatpush.xpose.msra.mxu0 0.0
    %463 = vmatpush.xpose.msra.mxu0 0.0
    %464 = vmatpush.xpose.msra.mxu0 %v447
    %465 = vmatmul.f32.gmra.mxu0 %v145
    %v466 = vpop.f32.mrf.mxu0
    %v467 = vadd.f32 0.0, %v466
    %468 = vdwg.mxu0
    %470 = vrot.lane.b32.xlu0 %v443, 96
    %v471 = vpop.permute.xlu0 %470
    %v472 = vsel %vm37, %v471, 0
    %474 = vmatpush.xpose.msra.mxu0 0.0
    %475 = vmatpush.xpose.msra.mxu0 0.0
    %476 = vmatpush.xpose.msra.mxu0 0.0
    %477 = vmatpush.xpose.msra.mxu0 0.0
    %478 = vmatpush.xpose.msra.mxu0 0.0
    %479 = vmatpush.xpose.msra.mxu0 0.0
    %480 = vmatpush.xpose.msra.mxu0 0.0
    %481 = vmatpush.xpose.msra.mxu0 0.0
    %482 = vmatpush.xpose.msra.mxu0 0.0
    %483 = vmatpush.xpose.msra.mxu0 0.0
    %484 = vmatpush.xpose.msra.mxu0 0.0
    %485 = vmatpush.xpose.msra.mxu0 0.0
    %486 = vmatpush.xpose.msra.mxu0 0.0
    %487 = vmatpush.xpose.msra.mxu0 0.0
    %488 = vmatpush.xpose.msra.mxu0 0.0
    %489 = vmatpush.xpose.msra.mxu0 %v472
    %490 = vmatmul.f32.gmra.mxu0 %v173
    %v491 = vpop.f32.mrf.mxu0
    %v492 = vadd.f32 0.0, %v491
    %493 = vdwg.mxu0
    %v494 = vmul.f32 %v467, 0.35355338
    %v495 = vmul.f32 %v492, 0.35355338
    %v496 = vadd.f32 %v494, %v132
    %v497 = vadd.f32 %v495, %v133
    %v498 = vsel %vm201, %v496, -inf
    %499 = vmax.xlane.f32.xlu0 %v498
    %v500 = vpop.xlane.xlu0 %499
    %v501 = vsel %vm201, %v497, -inf
    %502 = vmax.xlane.f32.xlu0 %v501
    %v503 = vpop.xlane.xlu0 %502
    %v504 = vsub.f32 %v496, %v500
    %v505 = vsub.f32 %v497, %v503
    %v506 = vmul.f32 %v504, 1.442695
    %v507 = vpow.pop %v506
    %v508 = vmul.f32 %v505, 1.442695
    %v509 = vpow.pop %v508
    %v510 = vsel %vm201, %v507, 0.0
    %511 = vadd.xlane.f32.xlu0 %v510
    %v512 = vpop.xlane.xlu0 %511
    %v513 = vsel %vm201, %v509, 0.0
    %514 = vadd.xlane.f32.xlu0 %v513
    %v515 = vpop.xlane.xlu0 %514
    %v516 = vrcp.pop %v512
    %v517 = vrcp.pop %v515
    %v518 = vmul.f32 %v512, %v516
    %v519 = vmul.f32 %v515, %v517
    %v520 = vsub.f32 2.0, %v518
    %v521 = vsub.f32 2.0, %v519
    %v522 = vmul.f32 %v516, %v520
    %v523 = vmul.f32 %v517, %v521
    %v524 = vmul.f32 %v507, %v522
    %v525 = vmul.f32 %v509, %v523
    %526 = vrot.lane.b32.xlu0 %v437, 64
    %v527 = vpop.permute.xlu0 %526
    %v529 = vmul.f32 %v127, %v527
    %v530 = vmul.f32 %v130, %v527
    %532 = vrot.lane.b32.xlu0 %v529, 64
    %v533 = vpop.permute.xlu0 %532
    %v536 = vsel %vm201, %v524, 0
    %538 = vmatpush.msra.mxu0 0.0
    %539 = vmatpush.msra.mxu0 0.0
    %540 = vmatpush.msra.mxu0 0.0
    %541 = vmatpush.msra.mxu0 0.0
    %542 = vmatpush.msra.mxu0 0.0
    %543 = vmatpush.msra.mxu0 0.0
    %544 = vmatpush.msra.mxu0 0.0
    %545 = vmatpush.msra.mxu0 0.0
    %546 = vmatpush.msra.mxu0 0.0
    %547 = vmatpush.msra.mxu0 0.0
    %548 = vmatpush.msra.mxu0 0.0
    %549 = vmatpush.msra.mxu0 0.0
    %550 = vmatpush.msra.mxu0 0.0
    %551 = vmatpush.msra.mxu0 0.0
    %552 = vmatpush.msra.mxu0 0.0
    %553 = vmatpush.msra.mxu0 %v533
    %554 = vmatmul.f32.gmra.mxu0 %v536
    %v555 = vpop.f32.mrf.mxu0
    %v556 = vadd.f32 0.0, %v555
    %557 = vdwg.mxu0
    %559 = vrot.lane.b32.xlu0 %v530, 64
    %v560 = vpop.permute.xlu0 %559
    %v563 = vsel %vm201, %v525, 0
    %565 = vmatpush.msra.mxu0 0.0
    %566 = vmatpush.msra.mxu0 0.0
    %567 = vmatpush.msra.mxu0 0.0
    %568 = vmatpush.msra.mxu0 0.0
    %569 = vmatpush.msra.mxu0 0.0
    %570 = vmatpush.msra.mxu0 0.0
    %571 = vmatpush.msra.mxu0 0.0
    %572 = vmatpush.msra.mxu0 0.0
    %573 = vmatpush.msra.mxu0 0.0
    %574 = vmatpush.msra.mxu0 0.0
    %575 = vmatpush.msra.mxu0 0.0
    %576 = vmatpush.msra.mxu0 0.0
    %577 = vmatpush.msra.mxu0 0.0
    %578 = vmatpush.msra.mxu0 0.0
    %579 = vmatpush.msra.mxu0 0.0
    %580 = vmatpush.msra.mxu0 %v560
    %581 = vmatmul.f32.gmra.mxu0 %v563
    %v582 = vpop.f32.mrf.mxu0
    %v583 = vadd.f32 0.0, %v582
    %584 = vdwg.mxu0
    %v585 = vadd.f32 %v408, %v556
    %v586 = vadd.f32 %v435, %v583
    %v587 = vperm.slane %v36, 1
    %589 = vrot.lane.b32.xlu0 %v587, 32
    %v590 = vpop.permute.xlu0 %589
    %v592 = vmul.f32 %v127, %v590
    %v593 = vmul.f32 %v130, %v590
    %595 = vrot.lane.b32.xlu0 %v592, 96
    %v596 = vpop.permute.xlu0 %595
    %v597 = vsel %vm37, %v596, 0
    %599 = vmatpush.xpose.msra.mxu0 0.0
    %600 = vmatpush.xpose.msra.mxu0 0.0
    %601 = vmatpush.xpose.msra.mxu0 0.0
    %602 = vmatpush.xpose.msra.mxu0 0.0
    %603 = vmatpush.xpose.msra.mxu0 0.0
    %604 = vmatpush.xpose.msra.mxu0 0.0
    %605 = vmatpush.xpose.msra.mxu0 0.0
    %606 = vmatpush.xpose.msra.mxu0 0.0
    %607 = vmatpush.xpose.msra.mxu0 0.0
    %608 = vmatpush.xpose.msra.mxu0 0.0
    %609 = vmatpush.xpose.msra.mxu0 0.0
    %610 = vmatpush.xpose.msra.mxu0 0.0
    %611 = vmatpush.xpose.msra.mxu0 0.0
    %612 = vmatpush.xpose.msra.mxu0 0.0
    %613 = vmatpush.xpose.msra.mxu0 0.0
    %614 = vmatpush.xpose.msra.mxu0 %v597
    %615 = vmatmul.f32.gmra.mxu0 %v145
    %v616 = vpop.f32.mrf.mxu0
    %v617 = vadd.f32 0.0, %v616
    %618 = vdwg.mxu0
    %620 = vrot.lane.b32.xlu0 %v593, 96
    %v621 = vpop.permute.xlu0 %620
    %v622 = vsel %vm37, %v621, 0
    %624 = vmatpush.xpose.msra.mxu0 0.0
    %625 = vmatpush.xpose.msra.mxu0 0.0
    %626 = vmatpush.xpose.msra.mxu0 0.0
    %627 = vmatpush.xpose.msra.mxu0 0.0
    %628 = vmatpush.xpose.msra.mxu0 0.0
    %629 = vmatpush.xpose.msra.mxu0 0.0
    %630 = vmatpush.xpose.msra.mxu0 0.0
    %631 = vmatpush.xpose.msra.mxu0 0.0
    %632 = vmatpush.xpose.msra.mxu0 0.0
    %633 = vmatpush.xpose.msra.mxu0 0.0
    %634 = vmatpush.xpose.msra.mxu0 0.0
    %635 = vmatpush.xpose.msra.mxu0 0.0
    %636 = vmatpush.xpose.msra.mxu0 0.0
    %637 = vmatpush.xpose.msra.mxu0 0.0
    %638 = vmatpush.xpose.msra.mxu0 0.0
    %639 = vmatpush.xpose.msra.mxu0 %v622
    %640 = vmatmul.f32.gmra.mxu0 %v173
    %v641 = vpop.f32.mrf.mxu0
    %v642 = vadd.f32 0.0, %v641
    %643 = vdwg.mxu0
    %v644 = vmul.f32 %v617, 0.35355338
    %v645 = vmul.f32 %v642, 0.35355338
    %v646 = vadd.f32 %v644, %v132
    %v647 = vadd.f32 %v645, %v133
    %v648 = vsel %vm201, %v646, -inf
    %649 = vmax.xlane.f32.xlu0 %v648
    %v650 = vpop.xlane.xlu0 %649
    %v651 = vsel %vm201, %v647, -inf
    %652 = vmax.xlane.f32.xlu0 %v651
    %v653 = vpop.xlane.xlu0 %652
    %v654 = vsub.f32 %v646, %v650
    %v655 = vsub.f32 %v647, %v653
    %v656 = vmul.f32 %v654, 1.442695
    %v657 = vpow.pop %v656
    %v658 = vmul.f32 %v655, 1.442695
    %v659 = vpow.pop %v658
    %v660 = vsel %vm201, %v657, 0.0
    %661 = vadd.xlane.f32.xlu0 %v660
    %v662 = vpop.xlane.xlu0 %661
    %v663 = vsel %vm201, %v659, 0.0
    %664 = vadd.xlane.f32.xlu0 %v663
    %v665 = vpop.xlane.xlu0 %664
    %v666 = vrcp.pop %v662
    %v667 = vrcp.pop %v665
    %v668 = vmul.f32 %v662, %v666
    %v669 = vmul.f32 %v665, %v667
    %v670 = vsub.f32 2.0, %v668
    %v671 = vsub.f32 2.0, %v669
    %v672 = vmul.f32 %v666, %v670
    %v673 = vmul.f32 %v667, %v671
    %v674 = vmul.f32 %v657, %v672
    %v675 = vmul.f32 %v659, %v673
    %676 = vrot.lane.b32.xlu0 %v587, 64
    %v677 = vpop.permute.xlu0 %676
    %v679 = vmul.f32 %v127, %v677
    %v680 = vmul.f32 %v130, %v677
    %682 = vrot.lane.b32.xlu0 %v679, 64
    %v683 = vpop.permute.xlu0 %682
    %v686 = vsel %vm201, %v674, 0
    %688 = vmatpush.msra.mxu0 0.0
    %689 = vmatpush.msra.mxu0 0.0
    %690 = vmatpush.msra.mxu0 0.0
    %691 = vmatpush.msra.mxu0 0.0
    %692 = vmatpush.msra.mxu0 0.0
    %693 = vmatpush.msra.mxu0 0.0
    %694 = vmatpush.msra.mxu0 0.0
    %695 = vmatpush.msra.mxu0 0.0
    %696 = vmatpush.msra.mxu0 0.0
    %697 = vmatpush.msra.mxu0 0.0
    %698 = vmatpush.msra.mxu0 0.0
    %699 = vmatpush.msra.mxu0 0.0
    %700 = vmatpush.msra.mxu0 0.0
    %701 = vmatpush.msra.mxu0 0.0
    %702 = vmatpush.msra.mxu0 0.0
    %703 = vmatpush.msra.mxu0 %v683
    %704 = vmatmul.f32.gmra.mxu0 %v686
    %v705 = vpop.f32.mrf.mxu0
    %v706 = vadd.f32 0.0, %v705
    %707 = vdwg.mxu0
    %709 = vrot.lane.b32.xlu0 %v680, 64
    %v710 = vpop.permute.xlu0 %709
    %v713 = vsel %vm201, %v675, 0
    %715 = vmatpush.msra.mxu0 0.0
    %716 = vmatpush.msra.mxu0 0.0
    %717 = vmatpush.msra.mxu0 0.0
    %718 = vmatpush.msra.mxu0 0.0
    %719 = vmatpush.msra.mxu0 0.0
    %720 = vmatpush.msra.mxu0 0.0
    %721 = vmatpush.msra.mxu0 0.0
    %722 = vmatpush.msra.mxu0 0.0
    %723 = vmatpush.msra.mxu0 0.0
    %724 = vmatpush.msra.mxu0 0.0
    %725 = vmatpush.msra.mxu0 0.0
    %726 = vmatpush.msra.mxu0 0.0
    %727 = vmatpush.msra.mxu0 0.0
    %728 = vmatpush.msra.mxu0 0.0
    %729 = vmatpush.msra.mxu0 0.0
    %730 = vmatpush.msra.mxu0 %v710
    %731 = vmatmul.f32.gmra.mxu0 %v713
    %v732 = vpop.f32.mrf.mxu0
    %v733 = vadd.f32 0.0, %v732
    %734 = vdwg.mxu0
    %v735 = vadd.f32 %v585, %v706
    %v736 = vadd.f32 %v586, %v733
    %v737 = vld [vmem:[%s4] sm:$0xff]
    %v738 = vld [vmem:[%s4 + $0x8] sm:$0xff]
    %v739 = vld [vmem:[%s4 + $0x10] sm:$0xff]
    %v740 = vld [vmem:[%s4 + $0x18] sm:$0xff]
    %v741 = vperm.slane %v35, 4
    %v743 = vsel %vm37, %v735, 0
    %v746 = vsel %vm37, %v736, 0
    %748 = vmatpush.msra.mxu0 0.0
    %749 = vmatpush.msra.mxu0 0.0
    %750 = vmatpush.msra.mxu0 0.0
    %751 = vmatpush.msra.mxu0 0.0
    %752 = vmatpush.msra.mxu0 0.0
    %753 = vmatpush.msra.mxu0 0.0
    %754 = vmatpush.msra.mxu0 0.0
    %755 = vmatpush.msra.mxu0 0.0
    %756 = vmatpush.msra.mxu0 0.0
    %757 = vmatpush.msra.mxu0 0.0
    %758 = vmatpush.msra.mxu0 0.0
    %759 = vmatpush.msra.mxu0 0.0
    %760 = vmatpush.msra.mxu0 %v740
    %761 = vmatpush.msra.mxu0 %v739
    %762 = vmatpush.msra.mxu0 %v738
    %763 = vmatpush.msra.mxu0 %v737
    %764 = vmatmul.f32.gmra.mxu0 %v743
    %v765 = vpop.f32.mrf.mxu0
    %v766 = vadd.f32 %v741, %v765
    %767 = vmatmul.f32.gmra.mxu0 %v746
    %v768 = vpop.f32.mrf.mxu0
    %v769 = vadd.f32 %v741, %v768
    %770 = vdwg.mxu0
    %v771 = vadd.f32 %v33, %v766
    %v772 = vadd.f32 %v34, %v769
    %v773 = vsel %vm37, %v771, 0.0
    %774 = vadd.xlane.f32.xlu0 %v773
    %v775 = vpop.xlane.xlu0 %774
    %v776 = vsel %vm37, %v772, 0.0
    %777 = vadd.xlane.f32.xlu0 %v776
    %v778 = vpop.xlane.xlu0 %777
    %v779 = vmul.f32 %v775, %v50
    %v780 = vmul.f32 %v778, %v50
    %v781 = vsub.f32 %v771, %v779
    %v782 = vsub.f32 %v772, %v780
    %v783 = vmul.f32 %v781, %v781
    %v784 = vmul.f32 %v782, %v782
    %v785 = vsel %vm37, %v783, 0.0
    %786 = vadd.xlane.f32.xlu0 %v785
    %v787 = vpop.xlane.xlu0 %786
    %v788 = vsel %vm37, %v784, 0.0
    %789 = vadd.xlane.f32.xlu0 %v788
    %v790 = vpop.xlane.xlu0 %789
    %v791 = vmul.f32 %v787, %v50
    %v792 = vmul.f32 %v790, %v50
    %v793 = vadd.f32 %v791, 1e-05
    %v794 = vadd.f32 %v792, 1e-05
    %v795 = vrsqrt.pop %v793
    %v796 = vmul.f32 %v795, %v793
    %v797 = vmul.f32 %v796, %v795
    %v798 = vmul.f32 0.5, %v797
    %v799 = vsub.f32 1.5, %v798
    %v800 = vmul.f32 %v795, %v799
    %vm801 = vweird.f32 %v793
    %vm802 = vweird.f32 %v795
    %vm803 = vmor %vm801, %vm802
    %v804 = vsel %vm803, %v795, %v800
    %v805 = vrsqrt.pop %v794
    %v806 = vmul.f32 %v805, %v794
    %v807 = vmul.f32 %v806, %v805
    %v808 = vmul.f32 0.5, %v807
    %v809 = vsub.f32 1.5, %v808
    %v810 = vmul.f32 %v805, %v809
    %vm811 = vweird.f32 %v794
    %vm812 = vweird.f32 %v805
    %vm813 = vmor %vm811, %vm812
    %v814 = vsel %vm813, %v805, %v810
    %v815 = vmul.f32 %v781, %v804
    %v816 = vmul.f32 %v782, %v814
    %v817 = vperm.slane %v35, 2
    %v818 = vmul.f32 %v815, %v817
    %v819 = vmul.f32 %v816, %v817
    %v820 = vperm.slane %v35, 3
    %v821 = vadd.f32 %v818, %v820
    %v822 = vadd.f32 %v819, %v820
    %v823 = vld [vmem:[%s5] sm:$0xff]
    %v824 = vld [vmem:[%s5 + $0x8] sm:$0xff]
    %v825 = vld [vmem:[%s5 + $0x10] sm:$0xff]
    %v826 = vld [vmem:[%s5 + $0x18] sm:$0xff]
    %v827 = vld [vmem:[%s6] sm:$0x1]
    %v829 = vperm.slane %v827, 0
    %v832 = vsel %vm37, %v821, 0
    %v835 = vsel %vm37, %v822, 0
    %837 = vmatpush.msra.mxu0 0.0
    %838 = vmatpush.msra.mxu0 0.0
    %839 = vmatpush.msra.mxu0 0.0
    %840 = vmatpush.msra.mxu0 0.0
    %841 = vmatpush.msra.mxu0 0.0
    %842 = vmatpush.msra.mxu0 0.0
    %843 = vmatpush.msra.mxu0 0.0
    %844 = vmatpush.msra.mxu0 0.0
    %845 = vmatpush.msra.mxu0 0.0
    %846 = vmatpush.msra.mxu0 0.0
    %847 = vmatpush.msra.mxu0 0.0
    %848 = vmatpush.msra.mxu0 0.0
    %849 = vmatpush.msra.mxu0 %v826
    %850 = vmatpush.msra.mxu0 %v825
    %851 = vmatpush.msra.mxu0 %v824
    %852 = vmatpush.msra.mxu0 %v823
    %853 = vmatmul.f32.gmra.mxu0 %v832
    %v854 = vpop.f32.mrf.mxu0
    %v855 = vadd.f32 %v829, %v854
    %856 = vmatmul.f32.gmra.mxu0 %v835
    %v857 = vpop.f32.mrf.mxu0
    %v858 = vadd.f32 %v829, %v857
    %859 = vdwg.mxu0
    %v860 = vmul.f32 %v855, 0.5
    %v861 = vmul.f32 %v858, 0.5
    %v862 = vmul.f32 %v855, 0.70710677
    %v863 = vmul.f32 %v858, 0.70710677
    %v864 = vmul.f32 %v862, %v862
    %v865 = vmin.f32 16.0, %v864
    %v866 = vmul.f32 %v865, 2.1237322e-06
    %v867 = vadd.f32 %v866, 0.00028619796
    %v868 = vmul.f32 %v865, %v867
    %v869 = vadd.f32 %v868, 0.0036580483
    %v870 = vmul.f32 %v865, %v869
    %v871 = vadd.f32 %v870, 0.05243302
    %v872 = vmul.f32 %v865, %v871
    %v873 = vadd.f32 %v872, 0.18741608
    %v874 = vmul.f32 %v865, %v873
    %v875 = vadd.f32 %v874, 1.1283791
    %v876 = vmul.f32 %v862, %v875
    %v877 = vmul.f32 %v865, 3.8918573e-05
    %v878 = vadd.f32 %v877, 0.001143296
    %v879 = vmul.f32 %v865, %v878
    %v880 = vadd.f32 %v879, 0.014752088
    %v881 = vmul.f32 %v865, %v880
    %v882 = vadd.f32 %v881, 0.112945676
    %v883 = vmul.f32 %v865, %v882
    %v884 = vadd.f32 %v883, 0.4994258
    %v885 = vmul.f32 %v865, %v884
    %v886 = vadd.f32 %v885, 1.0
    %v887 = vrcp.pop %v886
    %v888 = vmul.f32 %v886, %v887
    %v889 = vsub.f32 1.0, %v888
    %v890 = vmul.f32 %v887, %v889
    %v891 = vadd.f32 %v887, %v890
    %vm892 = vweird.f32 %v886
    %vm893 = vweird.f32 %v887
    %vm894 = vmor %vm892, %vm893
    %v895 = vsel %vm894, %v887, %v891
    %v896 = vand.u32 2147483647, %v886
    %vm897 = vcmp.eq.f32.partialorder %v896, 8.507059e+37
    %v898 = vand.u32 %v886, 2147483648
    %v899 = vor.u32 1.1754944e-38, %v898
    %v900 = vsel %vm897, %v899, %v895
    %v901 = vmul.f32 %v876, %v900
    %v902 = vmin.f32 %v901, 1.0
    %v903 = vmax.f32 %v902, -1.0
    %v904 = vmul.f32 %v863, %v863
    %v905 = vmin.f32 16.0, %v904
    %v906 = vmul.f32 %v905, 2.1237322e-06
    %v907 = vadd.f32 %v906, 0.00028619796
    %v908 = vmul.f32 %v905, %v907
    %v909 = vadd.f32 %v908, 0.0036580483
    %v910 = vmul.f32 %v905, %v909
    %v911 = vadd.f32 %v910, 0.05243302
    %v912 = vmul.f32 %v905, %v911
    %v913 = vadd.f32 %v912, 0.18741608
    %v914 = vmul.f32 %v905, %v913
    %v915 = vadd.f32 %v914, 1.1283791
    %v916 = vmul.f32 %v863, %v915
    %v917 = vmul.f32 %v905, 3.8918573e-05
    %v918 = vadd.f32 %v917, 0.001143296
    %v919 = vmul.f32 %v905, %v918
    %v920 = vadd.f32 %v919, 0.014752088
    %v921 = vmul.f32 %v905, %v920
    %v922 = vadd.f32 %v921, 0.112945676
    %v923 = vmul.f32 %v905, %v922
    %v924 = vadd.f32 %v923, 0.4994258
    %v925 = vmul.f32 %v905, %v924
    %v926 = vadd.f32 %v925, 1.0
    %v927 = vrcp.pop %v926
    %v928 = vmul.f32 %v926, %v927
    %v929 = vsub.f32 1.0, %v928
    %v930 = vmul.f32 %v927, %v929
    %v931 = vadd.f32 %v927, %v930
    %vm932 = vweird.f32 %v926
    %vm933 = vweird.f32 %v927
    %vm934 = vmor %vm932, %vm933
    %v935 = vsel %vm934, %v927, %v931
    %v936 = vand.u32 2147483647, %v926
    %vm937 = vcmp.eq.f32.partialorder %v936, 8.507059e+37
    %v938 = vand.u32 %v926, 2147483648
    %v939 = vor.u32 1.1754944e-38, %v938
    %v940 = vsel %vm937, %v939, %v935
    %v941 = vmul.f32 %v916, %v940
    %v942 = vmin.f32 %v941, 1.0
    %v943 = vmax.f32 %v942, -1.0
    %v944 = vadd.f32 %v903, 1.0
    %v945 = vadd.f32 %v943, 1.0
    %v946 = vmul.f32 %v860, %v944
    %v947 = vmul.f32 %v861, %v945
    %v948 = vld [vmem:[%s7] sm:$0xff]
    %v949 = vld [vmem:[%s7 + $0x8] sm:$0xff]
    %v950 = vld [vmem:[%s7 + $0x10] sm:$0xff]
    %v951 = vld [vmem:[%s7 + $0x18] sm:$0xff]
    %v952 = vld [vmem:[%s7 + $0x20] sm:$0xff]
    %v953 = vld [vmem:[%s7 + $0x28] sm:$0xff]
    %v954 = vld [vmem:[%s7 + $0x30] sm:$0xff]
    %v955 = vld [vmem:[%s7 + $0x38] sm:$0xff]
    %v956 = vld [vmem:[%s7 + $0x40] sm:$0xff]
    %v957 = vld [vmem:[%s7 + $0x48] sm:$0xff]
    %v958 = vld [vmem:[%s7 + $0x50] sm:$0xff]
    %v959 = vld [vmem:[%s7 + $0x58] sm:$0xff]
    %v960 = vld [vmem:[%s7 + $0x60] sm:$0xff]
    %v961 = vld [vmem:[%s7 + $0x68] sm:$0xff]
    %v962 = vld [vmem:[%s7 + $0x70] sm:$0xff]
    %v963 = vld [vmem:[%s7 + $0x78] sm:$0xff]
    %v964 = vperm.slane %v35, 5
    %965 = vmatpush.msra.mxu0 %v963
    %966 = vmatpush.msra.mxu0 %v962
    %967 = vmatpush.msra.mxu0 %v961
    %968 = vmatpush.msra.mxu0 %v960
    %969 = vmatpush.msra.mxu0 %v959
    %970 = vmatpush.msra.mxu0 %v958
    %971 = vmatpush.msra.mxu0 %v957
    %972 = vmatpush.msra.mxu0 %v956
    %973 = vmatpush.msra.mxu0 %v955
    %974 = vmatpush.msra.mxu0 %v954
    %975 = vmatpush.msra.mxu0 %v953
    %976 = vmatpush.msra.mxu0 %v952
    %977 = vmatpush.msra.mxu0 %v951
    %978 = vmatpush.msra.mxu0 %v950
    %979 = vmatpush.msra.mxu0 %v949
    %980 = vmatpush.msra.mxu0 %v948
    %981 = vmatmul.f32.gmra.mxu0 %v946
    %v982 = vpop.f32.mrf.mxu0
    %v983 = vadd.f32 %v964, %v982
    %984 = vmatmul.f32.gmra.mxu0 %v947
    %v985 = vpop.f32.mrf.mxu0
    %v986 = vadd.f32 %v964, %v985
    %987 = vdwg.mxu0
    %v988 = vadd.f32 %v771, %v983
    %v989 = vadd.f32 %v772, %v986
    %990 = vst.msk [vmem:[#allocation2] sm:$0xff] %vm37, %v988
    %991 = vst.msk [vmem:[#allocation2 + $0x8] sm:$0xff] %vm37, %v989
    // Predicated region
    $region38: #{tpu_custom_call.1} parent=1 // pred_check
      _
    $region39: #{tpu_custom_call.1} parent=1 // pred_check_branch
      %993 = sbr.rel (0) target = $region41
    $region40: #{tpu_custom_call.1} parent=1 // pred_region
      %995 = vsyncadd [#allocation3], 0
      %s996 = sshll.u32 [#allocation2], 4
      %s997 = int_to_ptr.vmem [resolvable:$true] %s996
      %s998 = sshll.u32 %s9, 4
      %s999 = int_to_ptr.hbm [resolvable:$true] %s998
      %1004 = dma.vmem_to_hbm [thread:$0]  %s997, 256, %s999, [#allocation3], 128, 128, 8
    $region41: #{tpu_custom_call.1} parent=1 // pred_fallthru
      _
    // Predicated region
    $region42: #{tpu_custom_call.1} parent=1 // pred_check
      _
    $region43: #{tpu_custom_call.1} parent=1 // pred_check_branch
      %1006 = sbr.rel (0) target = $region45
    $region44: #{tpu_custom_call.1} parent=1 // pred_region
      %1008 = dma.done [#allocation3], 256
    $region45: #{tpu_custom_call.1} parent=1 // pred_fallthru
      _
    %1009 = vsyncpa [#allocation3], 1

</llo_original>
